<compile_context>
chip_gen: v6e
topology: v6e:2x2x1
jax: 0.10.0
libtpu: 0.0.40
codegen_flags: <defaults>
</compile_context>

<pallas_src>
import functools

import jax
import jax.numpy as jnp
import numpy as np
from jax import lax
from jax.experimental import pallas as pl
from jax.experimental.pallas import tpu as pltpu


def _wce_kernel(logits_ref, targets_ref, num_ref, den_ref,
                m_sc, l_sc, tl_sc, *,
                eos_token_id, eos_weight, ignore_index,
                separate_ids, separate_weight, tile_v):
    j = pl.program_id(1)
    nj = pl.num_programs(1)

    # reset the per-row running stats at the first vocab chunk of each row tile
    @pl.when(j == 0)
    def _():
        m_sc[...] = jnp.full_like(m_sc, -jnp.inf)
        l_sc[...] = jnp.zeros_like(l_sc)
        tl_sc[...] = jnp.zeros_like(tl_sc)

    x = logits_ref[...].astype(jnp.float32)      # (tile_n, tile_v)
    t = targets_ref[...]                         # (tile_n, 1) int32

    # ---- online log-sum-exp over vocab chunks ----
    m_prev = m_sc[...]
    m_new = jnp.maximum(m_prev, jnp.max(x, axis=-1, keepdims=True))
    alpha = jnp.exp(m_prev - m_new)
    l_sc[...] = alpha * l_sc[...] + jnp.sum(jnp.exp(x - m_new),
                                            axis=-1, keepdims=True)
    m_sc[...] = m_new

    # ---- gather the target logit from this vocab chunk (one-hot sum) ----
    # TODO(synk): iota could be cached in VMEM scratch if VALU ever becomes the
    # binding slot; kernel is HBM-bound so it is regenerated per step for now.
    col = lax.broadcasted_iota(jnp.int32, x.shape, 1) + j * tile_v
    tl_sc[...] += jnp.sum(jnp.where(col == t, x, 0.0), axis=-1, keepdims=True)

    # ---- finalize this row tile after the last vocab chunk ----
    @pl.when(j == nj - 1)
    def _():
        lse = m_sc[...] + jnp.log(l_sc[...])                      # (tile_n, 1)
        valid = t != ignore_index
        # CrossEntropyLoss(reduction='none', ignore_index) -> 0 at ignored rows
        loss = jnp.where(valid, lse - tl_sc[...], 0.0)

        w = jnp.ones_like(loss)
        w = jnp.where(t == eos_token_id, jnp.float32(eos_weight), w)
        for sid in separate_ids:
            w = jnp.where(t == sid, jnp.float32(separate_weight), w)

        num_ref[...] = loss * w                                   # numerator terms
        den_ref[...] = jnp.where(valid, w, 0.0)                   # denominator terms


def _round_up(a, b):
    return (a + b - 1) // b * b


def weighted_cross_entropy(logits, targets, *, eos_token_id, eos_weight,
                           ignore_index, separate_ids, separate_weight,
                           tile_n=512, tile_v=2048):
    """logits: [N, V] float (any float dtype); targets: [N] int.

    Returns the scalar weighted loss, matching the PyTorch module's forward.
    """
    N, V = logits.shape

    # clamp tiles for small problems, keep (8, 128) alignment
    tile_n = min(tile_n, _round_up(N, 8))
    tile_v = min(tile_v, _round_up(V, 128))

    Np = _round_up(N, tile_n)
    Vp = _round_up(V, tile_v)
    pad_n = Np - N
    pad_v = Vp - V

    # pad vocab (and rows) with a very negative finite logit so padded columns
    # contribute nothing to the log-sum-exp; padded rows get ignore_index.
    if pad_n or pad_v:
        logits = jnp.pad(logits, ((0, pad_n), (0, pad_v)),
                         constant_values=-1e30)
    if pad_n:
        targets = jnp.pad(targets, ((0, pad_n),), constant_values=ignore_index)
    targets2d = targets.reshape(Np, 1).astype(jnp.int32)

    kernel = functools.partial(
        _wce_kernel,
        eos_token_id=int(eos_token_id), eos_weight=float(eos_weight),
        ignore_index=int(ignore_index), separate_ids=tuple(int(s) for s in separate_ids),
        separate_weight=float(separate_weight), tile_v=tile_v)

    itemsize = jnp.dtype(logits.dtype).itemsize
    cost = pl.CostEstimate(
        flops=5 * Np * Vp,
        transcendentals=Np * Vp,
        bytes_accessed=Np * Vp * itemsize + 3 * Np * 4)

    num, den = pl.pallas_call(
        kernel,
        out_shape=(jax.ShapeDtypeStruct((Np, 1), jnp.float32),
                   jax.ShapeDtypeStruct((Np, 1), jnp.float32)),
        grid_spec=pltpu.PrefetchScalarGridSpec(
            num_scalar_prefetch=0,
            grid=(Np // tile_n, Vp // tile_v),        # vocab (reduction) axis last
            in_specs=[
                pl.BlockSpec((tile_n, tile_v), lambda i, j: (i, j)),
                pl.BlockSpec((tile_n, 1), lambda i, j: (i, 0)),
            ],
            out_specs=[
                pl.BlockSpec((tile_n, 1), lambda i, j: (i, 0)),
                pl.BlockSpec((tile_n, 1), lambda i, j: (i, 0)),
            ],
            scratch_shapes=[
                pltpu.VMEM((tile_n, 1), jnp.float32),   # running max
                pltpu.VMEM((tile_n, 1), jnp.float32),   # running sum(exp)
                pltpu.VMEM((tile_n, 1), jnp.float32),   # running target logit
            ]),
        compiler_params=pltpu.CompilerParams(
            dimension_semantics=("parallel", "arbitrary"),
            vmem_limit_bytes=48 << 20),
        cost_estimate=cost,
    )(logits, targets2d)

    # final reduction + division in plain JAX (padded rows contribute 0/0-weight)
    return num.sum() / den.sum()


def _reference(logits, targets, *, eos_token_id, eos_weight, ignore_index,
               separate_ids, separate_weight):
    """Pure-JAX reference mirroring the PyTorch forward."""
    logp = jax.nn.log_softmax(logits.astype(jnp.float32), axis=-1)
    safe_t = jnp.where(targets == ignore_index, 0, targets)
    nll = -jnp.take_along_axis(logp, safe_t[:, None], axis=-1)[:, 0]
    valid = targets != ignore_index
    loss = jnp.where(valid, nll, 0.0)
    w = jnp.ones_like(loss)
    w = jnp.where(targets == eos_token_id, eos_weight, w)
    for sid in separate_ids:
        w = jnp.where(targets == sid, separate_weight, w)
    return (loss * w).sum() / jnp.where(valid, w, 0.0).sum()


if __name__ == "__main__":
    # small shapes: batch=2, seq=8 -> N=16 flattened rows, vocab=32
    B, S, V = 2, 8, 32
    N = B * S
    eos_token_id = 2
    ignore_index = -100
    separate_ids = (3, 5)
    eos_weight = 2.0        # deterministic stand-ins for wandb.config.*
    separate_weight = 0.5

    key = jax.random.PRNGKey(0)
    k_logits, k_targets, k_mask = jax.random.split(key, 3)
    logits = jax.random.normal(k_logits, (N, V), dtype=jnp.float32)
    targets = jax.random.randint(k_targets, (N,), 0, V, dtype=jnp.int32)
    # sprinkle a few ignore_index positions
    ignore_mask = jax.random.bernoulli(k_mask, 0.2, (N,))
    targets = jnp.where(ignore_mask, jnp.int32(ignore_index), targets)

    out = weighted_cross_entropy(
        logits, targets,
        eos_token_id=eos_token_id, eos_weight=eos_weight,
        ignore_index=ignore_index, separate_ids=separate_ids,
        separate_weight=separate_weight)
    out = jax.block_until_ready(out)

    ref = _reference(
        logits, targets,
        eos_token_id=eos_token_id, eos_weight=eos_weight,
        ignore_index=ignore_index, separate_ids=separate_ids,
        separate_weight=separate_weight)

    assert np.allclose(np.asarray(out), np.asarray(ref), rtol=1e-5, atol=1e-5), (
        f"mismatch: kernel={out} ref={ref}")

    # second check at a less tiny, non-divisible shape to exercise padding + both grid axes
    N2, V2 = 300, 1000
    k1, k2, k3 = jax.random.split(jax.random.PRNGKey(1), 3)
    logits2 = jax.random.normal(k1, (N2, V2), dtype=jnp.float32)
    targets2 = jax.random.randint(k2, (N2,), 0, V2, dtype=jnp.int32)
    targets2 = jnp.where(jax.random.bernoulli(k3, 0.2, (N2,)),
                         jnp.int32(ignore_index), targets2)
    out2 = jax.block_until_ready(weighted_cross_entropy(
        logits2, targets2,
        eos_token_id=eos_token_id, eos_weight=eos_weight,
        ignore_index=ignore_index, separate_ids=separate_ids,
        separate_weight=separate_weight,
        tile_n=64, tile_v=512))
    ref2 = _reference(
        logits2, targets2,
        eos_token_id=eos_token_id, eos_weight=eos_weight,
        ignore_index=ignore_index, separate_ids=separate_ids,
        separate_weight=separate_weight)
    assert np.allclose(np.asarray(out2), np.asarray(ref2), rtol=1e-5, atol=1e-5), (
        f"mismatch (padded case): kernel={out2} ref={ref2}")

    print("KERNEL_OK")
</pallas_src>

<mosaic_0001>
module attributes {stable_mosaic.version = 11 : i64} {
  func.func @_wce_kernel(%arg0: i32, %arg1: i32, %arg2: memref<16x128xf32, #tpu.memory_space<vmem>>, %arg3: memref<16x1xi32, #tpu.memory_space<vmem>>, %arg4: memref<16x1xf32, #tpu.memory_space<vmem>>, %arg5: memref<16x1xf32, #tpu.memory_space<vmem>>, %arg6: memref<16x1xf32, #tpu.memory_space<vmem>>, %arg7: memref<16x1xf32, #tpu.memory_space<vmem>>, %arg8: memref<16x1xf32, #tpu.memory_space<vmem>>) attributes {dimension_semantics = [#tpu.dimension_semantics<parallel>, #tpu.dimension_semantics<arbitrary>], iteration_bounds = array<i64: 1, 1>, scalar_prefetch = 0 : i64, scratch_operands = 3 : i64, tpu.core_type = #tpu.core_type<tc>, window_params = [{transform_indices = @transform_0, window_bounds = array<i64: 16, 128>}, {transform_indices = @transform_1, window_bounds = array<i64: 16, 1>}, {transform_indices = @transform_2, window_bounds = array<i64: 16, 1>}, {transform_indices = @transform_3, window_bounds = array<i64: 16, 1>}]} {
    %c0_i32 = arith.constant 0 : i32
    %0 = arith.cmpi eq, %arg1, %c0_i32 : i32
    %1 = arith.extui %0 : i1 to i32
    %c0_i32_0 = arith.constant 0 : i32
    %2 = arith.cmpi ne, %1, %c0_i32_0 : i32
    scf.if %2 {
      %cst_21 = arith.constant 0xFF800000 : f32
      %37 = vector.broadcast %cst_21 : f32 to vector<16x1xf32>
      %c0_22 = arith.constant 0 : index
      %c0_23 = arith.constant 0 : index
      %38 = vector.load %arg6[%c0_22, %c0_23] : memref<16x1xf32, #tpu.memory_space<vmem>>, vector<16x1xf32>
      tpu.vector_store %arg6[%c0_22, %c0_23], %37 {strides = array<i32>} : memref<16x1xf32, #tpu.memory_space<vmem>>, vector<16x1xf32>,
      %cst_24 = arith.constant 0.000000e+00 : f32
      %39 = vector.broadcast %cst_24 : f32 to vector<16x1xf32>
      %c0_25 = arith.constant 0 : index
      %c0_26 = arith.constant 0 : index
      %40 = vector.load %arg7[%c0_25, %c0_26] : memref<16x1xf32, #tpu.memory_space<vmem>>, vector<16x1xf32>
      tpu.vector_store %arg7[%c0_25, %c0_26], %39 {strides = array<i32>} : memref<16x1xf32, #tpu.memory_space<vmem>>, vector<16x1xf32>,
      %cst_27 = arith.constant 0.000000e+00 : f32
      %41 = vector.broadcast %cst_27 : f32 to vector<16x1xf32>
      %c0_28 = arith.constant 0 : index
      %c0_29 = arith.constant 0 : index
      %42 = vector.load %arg8[%c0_28, %c0_29] : memref<16x1xf32, #tpu.memory_space<vmem>>, vector<16x1xf32>
      tpu.vector_store %arg8[%c0_28, %c0_29], %41 {strides = array<i32>} : memref<16x1xf32, #tpu.memory_space<vmem>>, vector<16x1xf32>,
    } else {
    }
    %c0 = arith.constant 0 : index
    %c0_1 = arith.constant 0 : index
    %3 = vector.load %arg2[%c0, %c0_1] : memref<16x128xf32, #tpu.memory_space<vmem>>, vector<16x128xf32>
    %c0_2 = arith.constant 0 : index
    %c0_3 = arith.constant 0 : index
    %4 = vector.load %arg3[%c0_2, %c0_3] : memref<16x1xi32, #tpu.memory_space<vmem>>, vector<16x1xi32>
    %c0_4 = arith.constant 0 : index
    %c0_5 = arith.constant 0 : index
    %5 = vector.load %arg6[%c0_4, %c0_5] : memref<16x1xf32, #tpu.memory_space<vmem>>, vector<16x1xf32>
    %cst = arith.constant dense<0xFF800000> : vector<16xf32>
    %6 = vector.multi_reduction <maximumf>, %3, %cst [1] : vector<16x128xf32> to vector<16xf32>
    %7 = vector.shape_cast %6 : vector<16xf32> to vector<16x1xf32>
    %8 = arith.maximumf %5, %7 : vector<16x1xf32>
    %9 = arith.subf %5, %8 : vector<16x1xf32>
    %10 = math.exp %9 : vector<16x1xf32>
    %c0_6 = arith.constant 0 : index
    %c0_7 = arith.constant 0 : index
    %11 = vector.load %arg7[%c0_6, %c0_7] : memref<16x1xf32, #tpu.memory_space<vmem>>, vector<16x1xf32>
    %12 = arith.mulf %10, %11 : vector<16x1xf32>
    %13 = vector.broadcast %8 : vector<16x1xf32> to vector<16x128xf32>
    %14 = arith.subf %3, %13 : vector<16x128xf32>
    %15 = math.exp %14 : vector<16x128xf32>
    %cst_8 = arith.constant dense<0.000000e+00> : vector<16xf32>
    %16 = vector.multi_reduction <add>, %15, %cst_8 [1] : vector<16x128xf32> to vector<16xf32>
    %17 = vector.shape_cast %16 : vector<16xf32> to vector<16x1xf32>
    %18 = arith.addf %12, %17 : vector<16x1xf32>
    %c0_9 = arith.constant 0 : index
    %c0_10 = arith.constant 0 : index
    %19 = vector.load %arg7[%c0_9, %c0_10] : memref<16x1xf32, #tpu.memory_space<vmem>>, vector<16x1xf32>
    tpu.vector_store %arg7[%c0_9, %c0_10], %18 {strides = array<i32>} : memref<16x1xf32, #tpu.memory_space<vmem>>, vector<16x1xf32>,
    %c0_11 = arith.constant 0 : index
    %c0_12 = arith.constant 0 : index
    %20 = vector.load %arg6[%c0_11, %c0_12] : memref<16x1xf32, #tpu.memory_space<vmem>>, vector<16x1xf32>
    tpu.vector_store %arg6[%c0_11, %c0_12], %8 {strides = array<i32>} : memref<16x1xf32, #tpu.memory_space<vmem>>, vector<16x1xf32>,
    %21 = tpu.iota {dimensions = array<i32: 1>} : vector<16x128xi32>
    %c128_i32 = arith.constant 128 : i32
    %22 = arith.muli %arg1, %c128_i32 : i32
    %23 = vector.broadcast %22 : i32 to vector<16x128xi32>
    %24 = arith.addi %21, %23 : vector<16x128xi32>
    %c0_13 = arith.constant 0 : index
    %c0_14 = arith.constant 0 : index
    %25 = vector.load %arg8[%c0_13, %c0_14] : memref<16x1xf32, #tpu.memory_space<vmem>>, vector<16x1xf32>
    %26 = vector.broadcast %4 : vector<16x1xi32> to vector<16x128xi32>
    %27 = arith.cmpi eq, %24, %26 : vector<16x128xi32>
    %cst_15 = arith.constant 0.000000e+00 : f32
    %28 = vector.broadcast %cst_15 : f32 to vector<16x128xf32>
    %29 = arith.select %27, %3, %28 : vector<16x128xi1>, vector<16x128xf32>
    %cst_16 = arith.constant dense<0.000000e+00> : vector<16xf32>
    %30 = vector.multi_reduction <add>, %29, %cst_16 [1] : vector<16x128xf32> to vector<16xf32>
    %31 = vector.shape_cast %30 : vector<16xf32> to vector<16x1xf32>
    %32 = arith.addf %25, %31 : vector<16x1xf32>
    %c0_17 = arith.constant 0 : index
    %c0_18 = arith.constant 0 : index
    %33 = vector.load %arg8[%c0_17, %c0_18] : memref<16x1xf32, #tpu.memory_space<vmem>>, vector<16x1xf32>
    tpu.vector_store %arg8[%c0_17, %c0_18], %32 {strides = array<i32>} : memref<16x1xf32, #tpu.memory_space<vmem>>, vector<16x1xf32>,
    %c0_i32_19 = arith.constant 0 : i32
    %34 = arith.cmpi eq, %arg1, %c0_i32_19 : i32
    %35 = arith.extui %34 : i1 to i32
    %c0_i32_20 = arith.constant 0 : i32
    %36 = arith.cmpi ne, %35, %c0_i32_20 : i32
    scf.if %36 {
      %c0_21 = arith.constant 0 : index
      %c0_22 = arith.constant 0 : index
      %37 = vector.load %arg6[%c0_21, %c0_22] : memref<16x1xf32, #tpu.memory_space<vmem>>, vector<16x1xf32>
      %c0_23 = arith.constant 0 : index
      %c0_24 = arith.constant 0 : index
      %38 = vector.load %arg7[%c0_23, %c0_24] : memref<16x1xf32, #tpu.memory_space<vmem>>, vector<16x1xf32>
      %39 = math.log %38 : vector<16x1xf32>
      %40 = arith.addf %37, %39 : vector<16x1xf32>
      %c-100_i32 = arith.constant -100 : i32
      %41 = vector.broadcast %c-100_i32 : i32 to vector<16x1xi32>
      %42 = arith.cmpi ne, %4, %41 : vector<16x1xi32>
      %c0_25 = arith.constant 0 : index
      %c0_26 = arith.constant 0 : index
      %43 = vector.load %arg8[%c0_25, %c0_26] : memref<16x1xf32, #tpu.memory_space<vmem>>, vector<16x1xf32>
      %44 = arith.subf %40, %43 : vector<16x1xf32>
      %cst_27 = arith.constant 0.000000e+00 : f32
      %45 = vector.broadcast %cst_27 : f32 to vector<16x1xf32>
      %46 = arith.select %42, %44, %45 : vector<16x1xi1>, vector<16x1xf32>
      %cst_28 = arith.constant 1.000000e+00 : f32
      %47 = vector.broadcast %cst_28 : f32 to vector<16x1xf32>
      %c2_i32 = arith.constant 2 : i32
      %48 = vector.broadcast %c2_i32 : i32 to vector<16x1xi32>
      %49 = arith.cmpi eq, %4, %48 : vector<16x1xi32>
      %cst_29 = arith.constant 2.000000e+00 : f32
      %50 = vector.broadcast %cst_29 : f32 to vector<16x1xf32>
      %51 = arith.select %49, %50, %47 : vector<16x1xi1>, vector<16x1xf32>
      %c3_i32 = arith.constant 3 : i32
      %52 = vector.broadcast %c3_i32 : i32 to vector<16x1xi32>
      %53 = arith.cmpi eq, %4, %52 : vector<16x1xi32>
      %cst_30 = arith.constant 5.000000e-01 : f32
      %54 = vector.broadcast %cst_30 : f32 to vector<16x1xf32>
      %55 = arith.select %53, %54, %51 : vector<16x1xi1>, vector<16x1xf32>
      %c5_i32 = arith.constant 5 : i32
      %56 = vector.broadcast %c5_i32 : i32 to vector<16x1xi32>
      %57 = arith.cmpi eq, %4, %56 : vector<16x1xi32>
      %cst_31 = arith.constant 5.000000e-01 : f32
      %58 = vector.broadcast %cst_31 : f32 to vector<16x1xf32>
      %59 = arith.select %57, %58, %55 : vector<16x1xi1>, vector<16x1xf32>
      %60 = arith.mulf %46, %59 : vector<16x1xf32>
      %c0_32 = arith.constant 0 : index
      %c0_33 = arith.constant 0 : index
      %61 = vector.load %arg4[%c0_32, %c0_33] : memref<16x1xf32, #tpu.memory_space<vmem>>, vector<16x1xf32>
      tpu.vector_store %arg4[%c0_32, %c0_33], %60 {strides = array<i32>} : memref<16x1xf32, #tpu.memory_space<vmem>>, vector<16x1xf32>,
      %cst_34 = arith.constant 0.000000e+00 : f32
      %62 = vector.broadcast %cst_34 : f32 to vector<16x1xf32>
      %63 = arith.select %42, %59, %62 : vector<16x1xi1>, vector<16x1xf32>
      %c0_35 = arith.constant 0 : index
      %c0_36 = arith.constant 0 : index
      %64 = vector.load %arg5[%c0_35, %c0_36] : memref<16x1xf32, #tpu.memory_space<vmem>>, vector<16x1xf32>
      tpu.vector_store %arg5[%c0_35, %c0_36], %63 {strides = array<i32>} : memref<16x1xf32, #tpu.memory_space<vmem>>, vector<16x1xf32>,
    } else {
    }
    return
  }
  func.func @transform_0(%arg0: i32, %arg1: i32) -> (i32, i32) {
    %c0_i32 = arith.constant 0 : i32
    return %arg0, %arg1 : i32, i32
  }
  func.func @transform_1(%arg0: i32, %arg1: i32) -> (i32, i32) {
    %c0_i32 = arith.constant 0 : i32
    %c0_i32_0 = arith.constant 0 : i32
    return %arg0, %c0_i32 : i32, i32
  }
  func.func @transform_2(%arg0: i32, %arg1: i32) -> (i32, i32) {
    %c0_i32 = arith.constant 0 : i32
    %c0_i32_0 = arith.constant 0 : i32
    return %arg0, %c0_i32 : i32, i32
  }
  func.func @transform_3(%arg0: i32, %arg1: i32) -> (i32, i32) {
    %c0_i32 = arith.constant 0 : i32
    %c0_i32_0 = arith.constant 0 : i32
    return %arg0, %c0_i32 : i32, i32
  }
}

</mosaic_0001>

<llo_original>
// kernel: tpu_custom_call.1
$region0: #{tpu_custom_call.1}
  #allocation0 [shape = 'u32[]', space=smem, size = 0x4, offset = 0x4, fixed_abs, tag = 'smem constant byte address 0x4 - core index']
  #allocation1 [shape = 'u32[144,128]{1,0:T(1,128)}', space=vmem, size = 0x12000, scoped, tag = 'internal scratch']
  #allocation2 [shape = 'f32[16,1]{1,0:T(8,128)}', space=vmem, size = 0x2000, scoped, tag = 'scratch operand']
  #allocation3 [shape = 'f32[16,1]{1,0:T(8,128)}', space=vmem, size = 0x2000, scoped, tag = 'scratch operand']
  #allocation4 [shape = 'f32[16,1]{1,0:T(8,128)}', space=vmem, size = 0x2000, scoped, tag = 'scratch operand']
  %s0 = inlined_call_operand.vmem [shape: f32[16,128], index: 0, kind: input, shape index: {}]
  %s1 = inlined_call_operand.vmem [shape: s32[16,1], index: 1, kind: input, shape index: {}]
  %s2 = inlined_call_operand.vmem [shape: f32[16,1], index: 2, kind: output, shape index: {0}]
  %s3 = inlined_call_operand.vmem [shape: f32[16,1], index: 3, kind: output, shape index: {1}]
  %4 = xla_tuple %s2, %s3
  %s5 = sld [smem:[#allocation0]]
  $region34: #{tpu_custom_call.1} parent=0
    _
  %s7 = ssub.s32 1, %s5
  %s8 = scalar_select 0, %s7, %s5
  // Predicated region
  $region2: #{tpu_custom_call.1} parent=0 // pred_check
    _
  $region3: #{tpu_custom_call.1} parent=0 // pred_check_branch
    %10 = sbr.rel (0) target = $region5
  $region4: #{tpu_custom_call.1} parent=0 // pred_region
    _
  $region5: #{tpu_custom_call.1} parent=0 // pred_fallthru
    _
  // Predicated region
  $region6: #{tpu_custom_call.1} parent=0 // pred_check
    _
  $region7: #{tpu_custom_call.1} parent=0 // pred_check_branch
    %12 = sbr.rel (0) target = $region9
  $region8: #{tpu_custom_call.1} parent=0 // pred_region
    _
  $region9: #{tpu_custom_call.1} parent=0 // pred_fallthru
    _
  %p13 = scmp.eq.s32.totalorder 0, 0
  // Predicated region
  $region10: #{tpu_custom_call.1} parent=0 // pred_check
    %p14 = pneg %p13
  $region11: #{tpu_custom_call.1} parent=0 // pred_check_branch
    %16 = sbr.rel (%p14) target = $region13
  $region12: #{tpu_custom_call.1} parent=0 // pred_region
    %vm17 = vcmask 7168
    %18 = vst.msk [vmem:[#allocation2] sm:$0xff] %vm17, -inf
    %19 = vst.msk [vmem:[#allocation2 + $0x8] sm:$0xff] %vm17, -inf
    %20 = vst.msk [vmem:[#allocation3] sm:$0xff] %vm17, 0.0
    %21 = vst.msk [vmem:[#allocation3 + $0x8] sm:$0xff] %vm17, 0.0
    %22 = vst.msk [vmem:[#allocation4] sm:$0xff] %vm17, 0.0
    %23 = vst.msk [vmem:[#allocation4 + $0x8] sm:$0xff] %vm17, 0.0
  $region13: #{tpu_custom_call.1} parent=0 // pred_fallthru
    _
  %v24 = vld [vmem:[%s0] sm:$0xff]
  %v25 = vld [vmem:[%s0 + $0x8] sm:$0xff]
  %v26 = vld [vmem:[%s1] sm:$0xff]
  %v27 = vld [vmem:[%s1 + $0x8] sm:$0xff]
  %v28 = vld [vmem:[#allocation2] sm:$0xff]
  %v29 = vld [vmem:[#allocation2 + $0x8] sm:$0xff]
  %30 = vmax.xlane.f32.xlu0 %v24
  %v31 = vpop.xlane.xlu0 %30
  %32 = vmax.xlane.f32.xlu0 %v25
  %v33 = vpop.xlane.xlu0 %32
  %v34 = vmax.f32 %v28, %v31
  %v35 = vmax.f32 %v29, %v33
  %v36 = vsub.f32 %v28, %v34
  %v37 = vsub.f32 %v29, %v35
  %v38 = vmul.f32 %v36, 1.442695
  %v39 = vpow.pop %v38
  %v40 = vmul.f32 %v37, 1.442695
  %v41 = vpow.pop %v40
  %v42 = vld [vmem:[#allocation3] sm:$0xff]
  %v43 = vld [vmem:[#allocation3 + $0x8] sm:$0xff]
  %v44 = vmul.f32 %v39, %v42
  %v45 = vmul.f32 %v41, %v43
  %47 = vset.pattern.permute.xlu0 0
  %48 = vperm.xlu0 %47, %v34
  %v49 = vpop.permute.xlu0 %48
  %52 = vset.pattern.permute.xlu0 0
  %53 = vperm.xlu0 %52, %v35
  %v54 = vpop.permute.xlu0 %53
  %v56 = vsub.f32 %v24, %v49
  %v57 = vsub.f32 %v25, %v54
  %v58 = vmul.f32 %v56, 1.442695
  %v59 = vpow.pop %v58
  %v60 = vmul.f32 %v57, 1.442695
  %v61 = vpow.pop %v60
  %62 = vadd.xlane.f32.xlu0 %v59
  %v63 = vpop.xlane.xlu0 %62
  %64 = vadd.xlane.f32.xlu0 %v61
  %v65 = vpop.xlane.xlu0 %64
  %v66 = vadd.f32 %v44, %v63
  %v67 = vadd.f32 %v45, %v65
  %vm68 = vcmask 7168
  %69 = vst.msk [vmem:[#allocation3] sm:$0xff] %vm68, %v66
  %70 = vst.msk [vmem:[#allocation3 + $0x8] sm:$0xff] %vm68, %v67
  %71 = vst.msk [vmem:[#allocation2] sm:$0xff] %vm68, %v34
  %72 = vst.msk [vmem:[#allocation2 + $0x8] sm:$0xff] %vm68, %v35
  %v73 = vlaneseq
  %v74 = vand.u32 %v73, 127
  %s75 = smul.u32 0, 128
  %v76 = vstv %s75
  %v77 = vadd.s32 %v74, %v76
  %v78 = vld [vmem:[#allocation4] sm:$0xff]
  %v79 = vld [vmem:[#allocation4 + $0x8] sm:$0xff]
  %80 = vset.pattern.permute.xlu0 0
  %81 = vperm.xlu0 %80, %v26
  %v82 = vpop.permute.xlu0 %81
  %83 = vset.pattern.permute.xlu0 0
  %84 = vperm.xlu0 %83, %v27
  %v85 = vpop.permute.xlu0 %84
  %vm86 = vcmp.eq.s32.totalorder %v77, %v82
  %vm87 = vcmp.eq.s32.totalorder %v77, %v85
  %v88 = vsel %vm86, %v24, 0.0
  %v89 = vsel %vm87, %v25, 0.0
  %90 = vadd.xlane.f32.xlu0 %v88
  %v91 = vpop.xlane.xlu0 %90
  %92 = vadd.xlane.f32.xlu0 %v89
  %v93 = vpop.xlane.xlu0 %92
  %v94 = vadd.f32 %v78, %v91
  %v95 = vadd.f32 %v79, %v93
  %96 = vst.msk [vmem:[#allocation4] sm:$0xff] %vm68, %v94
  %97 = vst.msk [vmem:[#allocation4 + $0x8] sm:$0xff] %vm68, %v95
  // Predicated region
  $region14: #{tpu_custom_call.1} parent=0 // pred_check
    %p98 = pneg %p13
  $region15: #{tpu_custom_call.1} parent=0 // pred_check_branch
    %100 = sbr.rel (%p98) target = $region17
  $region16: #{tpu_custom_call.1} parent=0 // pred_region
    %v101 = vld [vmem:[#allocation2] sm:$0xff]
    %v102 = vld [vmem:[#allocation2 + $0x8] sm:$0xff]
    %v103 = vld [vmem:[#allocation3] sm:$0xff]
    %v104 = vld [vmem:[#allocation3 + $0x8] sm:$0xff]
    %v105 = vlog2.pop %v103
    %v106 = vmul.f32 %v105, 0.6931472
    %v107 = vlog2.pop %v104
    %v108 = vmul.f32 %v107, 0.6931472
    %v109 = vadd.f32 %v101, %v106
    %v110 = vadd.f32 %v102, %v108
    %vm111 = vcmp.ne.s32.totalorder %v26, 4294967196
    %vm112 = vcmp.ne.s32.totalorder %v27, 4294967196
    %v113 = vld [vmem:[#allocation4] sm:$0xff]
    %v114 = vld [vmem:[#allocation4 + $0x8] sm:$0xff]
    %v115 = vsub.f32 %v109, %v113
    %v116 = vsub.f32 %v110, %v114
    %v117 = vsel %vm111, %v115, 0.0
    %v118 = vsel %vm112, %v116, 0.0
    %vm119 = vcmp.eq.s32.totalorder %v26, 2
    %vm120 = vcmp.eq.s32.totalorder %v27, 2
    %v121 = vsel %vm119, 2.0, 1.0
    %v122 = vsel %vm120, 2.0, 1.0
    %vm123 = vcmp.eq.s32.totalorder %v26, 3
    %vm124 = vcmp.eq.s32.totalorder %v27, 3
    %v125 = vsel %vm123, 0.5, %v121
    %v126 = vsel %vm124, 0.5, %v122
    %vm127 = vcmp.eq.s32.totalorder %v26, 5
    %vm128 = vcmp.eq.s32.totalorder %v27, 5
    %v129 = vsel %vm127, 0.5, %v125
    %v130 = vsel %vm128, 0.5, %v126
    %v131 = vmul.f32 %v117, %v129
    %v132 = vmul.f32 %v118, %v130
    %133 = vst.msk [vmem:[%s2] sm:$0xff] %vm68, %v131
    %134 = vst.msk [vmem:[%s2 + $0x8] sm:$0xff] %vm68, %v132
    %v135 = vsel %vm111, %v129, 0.0
    %v136 = vsel %vm112, %v130, 0.0
    %137 = vst.msk [vmem:[%s3] sm:$0xff] %vm68, %v135
    %138 = vst.msk [vmem:[%s3 + $0x8] sm:$0xff] %vm68, %v136
  $region17: #{tpu_custom_call.1} parent=0 // pred_fallthru
    _
  // Predicated region
  $region18: #{tpu_custom_call.1} parent=0 // pred_check
    _
  $region19: #{tpu_custom_call.1} parent=0 // pred_check_branch
    %140 = sbr.rel (0) target = $region21
  $region20: #{tpu_custom_call.1} parent=0 // pred_region
    _
  $region21: #{tpu_custom_call.1} parent=0 // pred_fallthru
    _
  // Predicated region
  $region22: #{tpu_custom_call.1} parent=0 // pred_check
    _
  $region23: #{tpu_custom_call.1} parent=0 // pred_check_branch
    %142 = sbr.rel (0) target = $region25
  $region24: #{tpu_custom_call.1} parent=0 // pred_region
    _
  $region25: #{tpu_custom_call.1} parent=0 // pred_fallthru
    _
  // Predicated region
  $region26: #{tpu_custom_call.1} parent=0 // pred_check
    _
  $region27: #{tpu_custom_call.1} parent=0 // pred_check_branch
    %144 = sbr.rel (0) target = $region29
  $region28: #{tpu_custom_call.1} parent=0 // pred_region
    _
  $region29: #{tpu_custom_call.1} parent=0 // pred_fallthru
    _
  // Predicated region
  $region30: #{tpu_custom_call.1} parent=0 // pred_check
    _
  $region31: #{tpu_custom_call.1} parent=0 // pred_check_branch
    %146 = sbr.rel (0) target = $region33
  $region32: #{tpu_custom_call.1} parent=0 // pred_region
    _
  $region33: #{tpu_custom_call.1} parent=0 // pred_fallthru
    _

</llo_original>
